<compile_context>
chip_gen: v7x
topology: tpu7x:2x2x1
jax: 0.10.0
libtpu: 0.0.40
codegen_flags: <defaults>
</compile_context>

<pallas_src>
import functools
import math

import jax
import jax.numpy as jnp
from jax.experimental import pallas as pl
from jax.experimental.pallas import tpu as pltpu

BETA = 0.9
V_TH = 1.0
SPK_DTYPE = jnp.bfloat16   # spikes are exactly 0/1 -> bf16 is lossless
MEM_DTYPE = jnp.float32


def _lif_kernel(cur_ref, spk_out_ref, mem_out_ref, *, num_steps, group):
    """Pure-VPU LIF recurrence over `num_steps` on one D_out lane tile.

    cur_ref:     (B, tile_d)            precomputed input current (x@w+b)
    spk_out_ref: (T*B, tile_d)          spike record slab (row = t*B + b)
    mem_out_ref: (T*B, tile_d)          membrane record slab
    """
    cur = cur_ref[...]                       # loaded once; stays in vregs
    batch = cur.shape[0]
    rows_per_group = group * batch           # multiple of 8 when B divides 8
    num_groups = num_steps // group

    mem = jnp.zeros_like(cur)                # carries live in registers
    spk = jnp.zeros_like(cur)                # spike carry (no recompute)

    def run_group(base, mem, spk):
        spk_steps, mem_steps = [], []
        for _ in range(group):               # static unroll within a group
            mem = BETA * mem + cur - spk * V_TH
            spk = (mem > V_TH).astype(cur.dtype)
            spk_steps.append(spk)
            mem_steps.append(mem)
        # One sublane-dense store per group (unmasked vst when rows % 8 == 0).
        spk_out_ref[pl.ds(base, rows_per_group), :] = (
            jnp.concatenate(spk_steps, axis=0).astype(spk_out_ref.dtype))
        mem_out_ref[pl.ds(base, rows_per_group), :] = (
            jnp.concatenate(mem_steps, axis=0).astype(mem_out_ref.dtype))
        return mem, spk

    if num_groups <= 32:
        # Small T: fully unrolled, static store offsets.
        for g in range(num_groups):
            mem, spk = run_group(g * rows_per_group, mem, spk)
    else:
        # Large T: bounded code size; LLO still sees an unrolled window.
        def body(g, carry):
            base = pl.multiple_of(g * rows_per_group, rows_per_group)
            return run_group(base, *carry)

        _ = jax.lax.fori_loop(0, num_groups, body, (mem, spk), unroll=2)


def snn_forward(x_nchw, w, b, num_steps):
    """x_nchw: [B,C,H,W]; w: [D_in,D_out]; b: [1,D_out] -> (spk, mem) [T,B,D_out].

    spk_rec is returned as bf16 (exact 0/1); mem_rec is f32.
    """
    B = x_nchw.shape[0]
    x = x_nchw.reshape(B, -1).astype(jnp.float32)        # flatten NCHW -> [B, D_in]
    d_in, d_out = w.shape

    # One-time input current, computed once in XLA (MXU), not VMEM-resident
    # during the T-step recurrence.
    cur = (x @ w.astype(jnp.float32) + b.astype(jnp.float32)).astype(jnp.float32)

    # Pad D_out to a lane multiple: lane-dense stores, no ragged tile.
    d_out_p = ((d_out + 127) // 128) * 128
    if d_out_p != d_out:
        cur = jnp.pad(cur, ((0, 0), (0, d_out_p - d_out)))

    # Lane tile: prefer >= 2 tiles (v7x megacore), grow toward 512 lanes when
    # D_out is large to amortize the ~0.35us/grid-step overhead on v5e/v6e.
    tile_d = d_out_p
    for cand in (512, 256, 128):
        if d_out_p % cand == 0 and d_out_p // cand >= 2:
            tile_d = cand
            break
    grid = (d_out_p // tile_d,)

    # Group G consecutive time steps so each store writes G*B rows (a multiple
    # of 8 sublanes -> unmasked vst) when B divides 8.
    group = 1
    if B < 8 and 8 % B == 0:
        group = max(1, math.gcd(num_steps, 8 // B))

    rows = num_steps * B
    out_shape = (
        jax.ShapeDtypeStruct((rows, d_out_p), SPK_DTYPE),
        jax.ShapeDtypeStruct((rows, d_out_p), MEM_DTYPE),
    )

    grid_spec = pltpu.PrefetchScalarGridSpec(
        num_scalar_prefetch=0,
        grid=grid,
        in_specs=[pl.BlockSpec((B, tile_d), lambda j: (0, j))],        # cur slice
        out_specs=[
            pl.BlockSpec((rows, tile_d), lambda j: (0, j)),            # spk slab
            pl.BlockSpec((rows, tile_d), lambda j: (0, j)),            # mem slab
        ],
    )

    spk_bytes = rows * d_out_p * jnp.dtype(SPK_DTYPE).itemsize
    mem_bytes = rows * d_out_p * jnp.dtype(MEM_DTYPE).itemsize
    cost = pl.CostEstimate(
        flops=5 * num_steps * B * d_out_p,
        transcendentals=0,
        bytes_accessed=B * d_out_p * 4 + spk_bytes + mem_bytes,
    )

    # VMEM estimate: two double-buffered output blocks + cur block.
    # TODO(synk): for very large T, add an 'arbitrary' time-chunk grid axis
    # (mem carried in VMEM scratch) so the whole T slab is never resident
    # (v7x physical VMEM is 64 MiB, v5e default scoped limit is 16 MiB).
    vmem_est = 2 * (rows * tile_d * (2 + 4)) + 2 * B * tile_d * 4 + (1 << 20)
    compiler_kwargs = dict(dimension_semantics=("parallel",))
    if vmem_est > (16 << 20):
        compiler_kwargs["vmem_limit_bytes"] = min(int(vmem_est * 3 // 2), 100 << 20)

    spk_flat, mem_flat = pl.pallas_call(
        functools.partial(_lif_kernel, num_steps=num_steps, group=group),
        out_shape=out_shape,
        grid_spec=grid_spec,
        compiler_params=pltpu.CompilerParams(**compiler_kwargs),
        cost_estimate=cost,
    )(cur)

    # Free row-major reshape back to (T, B, D_out); strip lane padding.
    spk_rec = spk_flat.reshape(num_steps, B, d_out_p)[..., :d_out]
    mem_rec = mem_flat.reshape(num_steps, B, d_out_p)[..., :d_out]
    return spk_rec, mem_rec


def snn_forward_ref(x_nchw, w, b, num_steps):
    """Pure-JAX reference for sanity checking."""
    B = x_nchw.shape[0]
    x = x_nchw.reshape(B, -1).astype(jnp.float32)
    cur = x @ w + b
    mem = jnp.zeros((B, w.shape[1]), jnp.float32)
    spk = jnp.zeros_like(mem)
    spk_rec, mem_rec = [], []
    for _ in range(num_steps):
        mem = BETA * mem + cur - spk * V_TH
        spk = (mem > V_TH).astype(jnp.float32)
        spk_rec.append(spk)
        mem_rec.append(mem)
    return jnp.stack(spk_rec), jnp.stack(mem_rec)


if __name__ == "__main__":
    key = jax.random.PRNGKey(0)
    k_x, k_w, k_b = jax.random.split(key, 3)

    B, C, H, W = 2, 4, 16, 16          # small NCHW input
    D_IN = C * H * W
    D_OUT = 128                        # hidden / output neurons
    NUM_STEPS = 8

    x = jax.random.normal(k_x, (B, C, H, W), dtype=jnp.float32)
    # Deterministic "Linear" parameters (torch stores [D_out, D_in]; we keep the transpose).
    w = jax.random.normal(k_w, (D_IN, D_OUT), dtype=jnp.float32) * (1.0 / (D_IN ** 0.5))
    b = jax.random.normal(k_b, (1, D_OUT), dtype=jnp.float32) * 0.1

    spk, mem = snn_forward(x, w, b, NUM_STEPS)
    jax.block_until_ready((spk, mem))

    spk_r, mem_r = snn_forward_ref(x, w, b, NUM_STEPS)
    assert spk.shape == (NUM_STEPS, B, D_OUT) and mem.shape == (NUM_STEPS, B, D_OUT)
    assert spk.dtype == SPK_DTYPE and mem.dtype == MEM_DTYPE
    # Membrane (f32): numeric tolerance.  Spikes (bf16, exact 0/1): a strict
    # threshold can flip on values sitting exactly at V_TH, so compare
    # mismatch fraction, not allclose.
    assert jnp.allclose(mem, mem_r, atol=1e-4)
    mismatch_frac = jnp.mean(jnp.abs(spk.astype(jnp.float32) - spk_r))
    assert mismatch_frac < 0.01

    print("KERNEL_OK")
</pallas_src>

<mosaic_0001>
module attributes {stable_mosaic.version = 11 : i64} {
  func.func @_lif_kernel(%arg0: i32, %arg1: memref<2x128xf32, #tpu.memory_space<vmem>>, %arg2: memref<16x128xbf16, #tpu.memory_space<vmem>>, %arg3: memref<16x128xf32, #tpu.memory_space<vmem>>) attributes {dimension_semantics = [#tpu.dimension_semantics<parallel>], iteration_bounds = array<i64: 1>, scalar_prefetch = 0 : i64, scratch_operands = 0 : i64, tpu.core_type = #tpu.core_type<tc>, window_params = [{transform_indices = @transform_0, window_bounds = array<i64: 2, 128>}, {transform_indices = @transform_1, window_bounds = array<i64: 16, 128>}, {transform_indices = @transform_2, window_bounds = array<i64: 16, 128>}]} {
    %c0 = arith.constant 0 : index
    %c0_0 = arith.constant 0 : index
    %0 = vector.load %arg1[%c0, %c0_0] : memref<2x128xf32, #tpu.memory_space<vmem>>, vector<2x128xf32>
    %cst = arith.constant 0.000000e+00 : f32
    %1 = vector.broadcast %cst : f32 to vector<2x128xf32>
    %cst_1 = arith.constant 0.000000e+00 : f32
    %2 = vector.broadcast %cst_1 : f32 to vector<2x128xf32>
    %cst_2 = arith.constant 0.899999976 : f32
    %3 = vector.broadcast %cst_2 : f32 to vector<2x128xf32>
    %4 = arith.mulf %3, %1 : vector<2x128xf32>
    %5 = arith.addf %4, %0 : vector<2x128xf32>
    %cst_3 = arith.constant 1.000000e+00 : f32
    %6 = vector.broadcast %cst_3 : f32 to vector<2x128xf32>
    %7 = arith.mulf %2, %6 : vector<2x128xf32>
    %8 = arith.subf %5, %7 : vector<2x128xf32>
    %cst_4 = arith.constant 1.000000e+00 : f32
    %9 = vector.broadcast %cst_4 : f32 to vector<2x128xf32>
    %10 = arith.cmpf ogt, %8, %9 : vector<2x128xf32>
    %11 = arith.extui %10 : vector<2x128xi1> to vector<2x128xi32>
    %12 = arith.sitofp %11 : vector<2x128xi32> to vector<2x128xf32>
    %cst_5 = arith.constant 0.899999976 : f32
    %13 = vector.broadcast %cst_5 : f32 to vector<2x128xf32>
    %14 = arith.mulf %13, %8 : vector<2x128xf32>
    %15 = arith.addf %14, %0 : vector<2x128xf32>
    %cst_6 = arith.constant 1.000000e+00 : f32
    %16 = vector.broadcast %cst_6 : f32 to vector<2x128xf32>
    %17 = arith.mulf %12, %16 : vector<2x128xf32>
    %18 = arith.subf %15, %17 : vector<2x128xf32>
    %cst_7 = arith.constant 1.000000e+00 : f32
    %19 = vector.broadcast %cst_7 : f32 to vector<2x128xf32>
    %20 = arith.cmpf ogt, %18, %19 : vector<2x128xf32>
    %21 = arith.extui %20 : vector<2x128xi1> to vector<2x128xi32>
    %22 = arith.sitofp %21 : vector<2x128xi32> to vector<2x128xf32>
    %cst_8 = arith.constant 0.899999976 : f32
    %23 = vector.broadcast %cst_8 : f32 to vector<2x128xf32>
    %24 = arith.mulf %23, %18 : vector<2x128xf32>
    %25 = arith.addf %24, %0 : vector<2x128xf32>
    %cst_9 = arith.constant 1.000000e+00 : f32
    %26 = vector.broadcast %cst_9 : f32 to vector<2x128xf32>
    %27 = arith.mulf %22, %26 : vector<2x128xf32>
    %28 = arith.subf %25, %27 : vector<2x128xf32>
    %cst_10 = arith.constant 1.000000e+00 : f32
    %29 = vector.broadcast %cst_10 : f32 to vector<2x128xf32>
    %30 = arith.cmpf ogt, %28, %29 : vector<2x128xf32>
    %31 = arith.extui %30 : vector<2x128xi1> to vector<2x128xi32>
    %32 = arith.sitofp %31 : vector<2x128xi32> to vector<2x128xf32>
    %cst_11 = arith.constant 0.899999976 : f32
    %33 = vector.broadcast %cst_11 : f32 to vector<2x128xf32>
    %34 = arith.mulf %33, %28 : vector<2x128xf32>
    %35 = arith.addf %34, %0 : vector<2x128xf32>
    %cst_12 = arith.constant 1.000000e+00 : f32
    %36 = vector.broadcast %cst_12 : f32 to vector<2x128xf32>
    %37 = arith.mulf %32, %36 : vector<2x128xf32>
    %38 = arith.subf %35, %37 : vector<2x128xf32>
    %cst_13 = arith.constant 1.000000e+00 : f32
    %39 = vector.broadcast %cst_13 : f32 to vector<2x128xf32>
    %40 = arith.cmpf ogt, %38, %39 : vector<2x128xf32>
    %41 = arith.extui %40 : vector<2x128xi1> to vector<2x128xi32>
    %42 = arith.sitofp %41 : vector<2x128xi32> to vector<2x128xf32>
    %43 = tpu.concatenate %12, %22, %32, %42 in 0 : vector<2x128xf32>, vector<2x128xf32>, vector<2x128xf32>, vector<2x128xf32> -> vector<8x128xf32>
    %44 = arith.truncf %43 : vector<8x128xf32> to vector<8x128xbf16>
    %c0_14 = arith.constant 0 : index
    %c0_15 = arith.constant 0 : index
    %45 = vector.load %arg2[%c0_14, %c0_15] : memref<16x128xbf16, #tpu.memory_space<vmem>>, vector<8x128xbf16>
    tpu.vector_store %arg2[%c0_14, %c0_15], %44 {strides = array<i32>} : memref<16x128xbf16, #tpu.memory_space<vmem>>, vector<8x128xbf16>,
    %46 = tpu.concatenate %8, %18, %28, %38 in 0 : vector<2x128xf32>, vector<2x128xf32>, vector<2x128xf32>, vector<2x128xf32> -> vector<8x128xf32>
    %c0_16 = arith.constant 0 : index
    %c0_17 = arith.constant 0 : index
    %47 = vector.load %arg3[%c0_16, %c0_17] : memref<16x128xf32, #tpu.memory_space<vmem>>, vector<8x128xf32>
    tpu.vector_store %arg3[%c0_16, %c0_17], %46 {strides = array<i32>} : memref<16x128xf32, #tpu.memory_space<vmem>>, vector<8x128xf32>,
    %cst_18 = arith.constant 0.899999976 : f32
    %48 = vector.broadcast %cst_18 : f32 to vector<2x128xf32>
    %49 = arith.mulf %48, %38 : vector<2x128xf32>
    %50 = arith.addf %49, %0 : vector<2x128xf32>
    %cst_19 = arith.constant 1.000000e+00 : f32
    %51 = vector.broadcast %cst_19 : f32 to vector<2x128xf32>
    %52 = arith.mulf %42, %51 : vector<2x128xf32>
    %53 = arith.subf %50, %52 : vector<2x128xf32>
    %cst_20 = arith.constant 1.000000e+00 : f32
    %54 = vector.broadcast %cst_20 : f32 to vector<2x128xf32>
    %55 = arith.cmpf ogt, %53, %54 : vector<2x128xf32>
    %56 = arith.extui %55 : vector<2x128xi1> to vector<2x128xi32>
    %57 = arith.sitofp %56 : vector<2x128xi32> to vector<2x128xf32>
    %cst_21 = arith.constant 0.899999976 : f32
    %58 = vector.broadcast %cst_21 : f32 to vector<2x128xf32>
    %59 = arith.mulf %58, %53 : vector<2x128xf32>
    %60 = arith.addf %59, %0 : vector<2x128xf32>
    %cst_22 = arith.constant 1.000000e+00 : f32
    %61 = vector.broadcast %cst_22 : f32 to vector<2x128xf32>
    %62 = arith.mulf %57, %61 : vector<2x128xf32>
    %63 = arith.subf %60, %62 : vector<2x128xf32>
    %cst_23 = arith.constant 1.000000e+00 : f32
    %64 = vector.broadcast %cst_23 : f32 to vector<2x128xf32>
    %65 = arith.cmpf ogt, %63, %64 : vector<2x128xf32>
    %66 = arith.extui %65 : vector<2x128xi1> to vector<2x128xi32>
    %67 = arith.sitofp %66 : vector<2x128xi32> to vector<2x128xf32>
    %cst_24 = arith.constant 0.899999976 : f32
    %68 = vector.broadcast %cst_24 : f32 to vector<2x128xf32>
    %69 = arith.mulf %68, %63 : vector<2x128xf32>
    %70 = arith.addf %69, %0 : vector<2x128xf32>
    %cst_25 = arith.constant 1.000000e+00 : f32
    %71 = vector.broadcast %cst_25 : f32 to vector<2x128xf32>
    %72 = arith.mulf %67, %71 : vector<2x128xf32>
    %73 = arith.subf %70, %72 : vector<2x128xf32>
    %cst_26 = arith.constant 1.000000e+00 : f32
    %74 = vector.broadcast %cst_26 : f32 to vector<2x128xf32>
    %75 = arith.cmpf ogt, %73, %74 : vector<2x128xf32>
    %76 = arith.extui %75 : vector<2x128xi1> to vector<2x128xi32>
    %77 = arith.sitofp %76 : vector<2x128xi32> to vector<2x128xf32>
    %cst_27 = arith.constant 0.899999976 : f32
    %78 = vector.broadcast %cst_27 : f32 to vector<2x128xf32>
    %79 = arith.mulf %78, %73 : vector<2x128xf32>
    %80 = arith.addf %79, %0 : vector<2x128xf32>
    %cst_28 = arith.constant 1.000000e+00 : f32
    %81 = vector.broadcast %cst_28 : f32 to vector<2x128xf32>
    %82 = arith.mulf %77, %81 : vector<2x128xf32>
    %83 = arith.subf %80, %82 : vector<2x128xf32>
    %cst_29 = arith.constant 1.000000e+00 : f32
    %84 = vector.broadcast %cst_29 : f32 to vector<2x128xf32>
    %85 = arith.cmpf ogt, %83, %84 : vector<2x128xf32>
    %86 = arith.extui %85 : vector<2x128xi1> to vector<2x128xi32>
    %87 = arith.sitofp %86 : vector<2x128xi32> to vector<2x128xf32>
    %88 = tpu.concatenate %57, %67, %77, %87 in 0 : vector<2x128xf32>, vector<2x128xf32>, vector<2x128xf32>, vector<2x128xf32> -> vector<8x128xf32>
    %89 = arith.truncf %88 : vector<8x128xf32> to vector<8x128xbf16>
    %c8 = arith.constant 8 : index
    %c0_30 = arith.constant 0 : index
    %90 = vector.load %arg2[%c8, %c0_30] : memref<16x128xbf16, #tpu.memory_space<vmem>>, vector<8x128xbf16>
    tpu.vector_store %arg2[%c8, %c0_30], %89 {strides = array<i32>} : memref<16x128xbf16, #tpu.memory_space<vmem>>, vector<8x128xbf16>,
    %91 = tpu.concatenate %53, %63, %73, %83 in 0 : vector<2x128xf32>, vector<2x128xf32>, vector<2x128xf32>, vector<2x128xf32> -> vector<8x128xf32>
    %c8_31 = arith.constant 8 : index
    %c0_32 = arith.constant 0 : index
    %92 = vector.load %arg3[%c8_31, %c0_32] : memref<16x128xf32, #tpu.memory_space<vmem>>, vector<8x128xf32>
    tpu.vector_store %arg3[%c8_31, %c0_32], %91 {strides = array<i32>} : memref<16x128xf32, #tpu.memory_space<vmem>>, vector<8x128xf32>,
    return
  }
  func.func @transform_0(%arg0: i32) -> (i32, i32) {
    %c0_i32 = arith.constant 0 : i32
    %c0_i32_0 = arith.constant 0 : i32
    return %c0_i32, %arg0 : i32, i32
  }
  func.func @transform_1(%arg0: i32) -> (i32, i32) {
    %c0_i32 = arith.constant 0 : i32
    %c0_i32_0 = arith.constant 0 : i32
    return %c0_i32, %arg0 : i32, i32
  }
  func.func @transform_2(%arg0: i32) -> (i32, i32) {
    %c0_i32 = arith.constant 0 : i32
    %c0_i32_0 = arith.constant 0 : i32
    return %c0_i32, %arg0 : i32, i32
  }
}

</mosaic_0001>

<llo_original>
// kernel: tpu_custom_call.1
$region0: #{tpu_custom_call.1}
  #allocation0 [shape = 'u32[]', space=smem, size = 0x4, offset = 0x4, fixed_abs, tag = 'smem constant byte address 0x4 - core index']
  #allocation1 [shape = 'u32[144,128]{1,0:T(1,128)}', space=vmem, size = 0x12000, scoped, tag = 'internal scratch']
  %s0 = inlined_call_operand.hbm [shape: f32[2,128], index: 0, kind: input, shape index: {}]
  %s1 = inlined_call_operand.hbm [shape: bf16[16,128], index: 1, kind: output, shape index: {0}]
  %s2 = inlined_call_operand.hbm [shape: f32[16,128], index: 2, kind: output, shape index: {1}]
  %3 = xla_tuple %s1, %s2
  %s4 = sld [smem:[#allocation0]]
  $region26: #{tpu_custom_call.1} parent=0
    _
  %s6 = ssub.s32 1, %s4
  %s7 = scalar_select 0, %s6, %s4
  $region1: #{tpu_custom_call.1} parent=0
    #allocation2 [shape = 'u8[1024]{0}', space=vmem, size = 0x400, scoped, tag = 'input window, operand 0, single buffered']
    #allocation3 [shape = 's32[1]{0}', space=sflag, size = 0x4, scoped, tag = 'scoped memory for tpu_custom_call.1']
    #allocation4 [shape = 's32[1]{0}', space=sflag, size = 0x4, scoped, tag = 'scoped memory for tpu_custom_call.1']
    #allocation5 [shape = 'u8[4096]{0}', space=vmem, size = 0x1000, scoped, tag = 'output window, operand 0, single buffered']
    #allocation6 [shape = 'u8[8192]{0}', space=vmem, size = 0x2000, scoped, tag = 'output window, operand 1, single buffered']
    #allocation7 [shape = 's32[1]{0}', space=sflag, size = 0x4, scoped, tag = 'scoped memory for tpu_custom_call.1']
    %8 = vsyncpa [#allocation3], 0
    %9 = vsyncpa [#allocation4], 0
    %10 = vsyncpa [#allocation7], 0
    // Predicated region
    $region2: #{tpu_custom_call.1} parent=1 // pred_check
      _
    $region3: #{tpu_custom_call.1} parent=1 // pred_check_branch
      %12 = sbr.rel (0) target = $region5
    $region4: #{tpu_custom_call.1} parent=1 // pred_region
      %s14 = ssub.s32 32, 32
      %15 = vsyncadd [#allocation3], %s14
      %s17 = sshll.u32 [#allocation2], 4
      %s18 = int_to_ptr.vmem [resolvable:$true] %s17
      %20 = dma.hbm_to_vmem [thread:$0]  %s0, 32, %s18, [#allocation3]
    $region5: #{tpu_custom_call.1} parent=1 // pred_fallthru
      _
    // Predicated region
    $region6: #{tpu_custom_call.1} parent=1 // pred_check
      _
    $region7: #{tpu_custom_call.1} parent=1 // pred_check_branch
      %22 = sbr.rel (0) target = $region9
    $region8: #{tpu_custom_call.1} parent=1 // pred_region
      %23 = dma.done [#allocation3], 32
    $region9: #{tpu_custom_call.1} parent=1 // pred_fallthru
      _
    %v24 = vld [vmem:[#allocation2] sm:$0x3]
    %v25 = vadd.f32 %v24, 0.0
    %vm26 = vcmp.gt.f32.partialorder %v25, 1.0
    %v27 = vsel %vm26, 1, 0
    %v28 = vcvt.s32.f32 %v27
    %v29 = vmul.f32 %v25, 0.9
    %v30 = vadd.f32 %v29, %v24
    %v31 = vsub.f32 %v30, %v28
    %vm32 = vcmp.gt.f32.partialorder %v31, 1.0
    %v33 = vsel %vm32, 1, 0
    %v34 = vcvt.s32.f32 %v33
    %v35 = vmul.f32 %v31, 0.9
    %v36 = vadd.f32 %v35, %v24
    %v37 = vsub.f32 %v36, %v34
    %vm38 = vcmp.gt.f32.partialorder %v37, 1.0
    %v39 = vsel %vm38, 1, 0
    %v40 = vcvt.s32.f32 %v39
    %v41 = vmul.f32 %v37, 0.9
    %v42 = vadd.f32 %v41, %v24
    %v43 = vsub.f32 %v42, %v40
    %vm44 = vcmp.gt.f32.partialorder %v43, 1.0
    %v45 = vsel %vm44, 1, 0
    %v46 = vcvt.s32.f32 %v45
    %v48 = vrot.slane %v34, 6
    %v51 = vrot.slane %v40, 4
    %v54 = vrot.slane %v46, 2
    %vm56 = vcmask 1041408
    %v57 = vsel %vm56, %v28, %v48
    %vm58 = vcmask 1043456
    %v59 = vsel %vm58, %v57, %v51
    %vm60 = vcmask 1045504
    %v61 = vsel %vm60, %v59, %v54
    %v62 = vpack.c.bf16 %v61, %v61
    %63 = vst [vmem:[#allocation5] sm:$0xf] %v62
    %v65 = vrot.slane %v31, 6
    %v68 = vrot.slane %v37, 4
    %v71 = vrot.slane %v43, 2
    %v73 = vsel %vm56, %v25, %v65
    %v74 = vsel %vm58, %v73, %v68
    %v75 = vsel %vm60, %v74, %v71
    %76 = vst [vmem:[#allocation6] sm:$0xff] %v75
    %v77 = vmul.f32 %v43, 0.9
    %v78 = vadd.f32 %v77, %v24
    %v79 = vsub.f32 %v78, %v46
    %vm80 = vcmp.gt.f32.partialorder %v79, 1.0
    %v81 = vsel %vm80, 1, 0
    %v82 = vcvt.s32.f32 %v81
    %v83 = vmul.f32 %v79, 0.9
    %v84 = vadd.f32 %v83, %v24
    %v85 = vsub.f32 %v84, %v82
    %vm86 = vcmp.gt.f32.partialorder %v85, 1.0
    %v87 = vsel %vm86, 1, 0
    %v88 = vcvt.s32.f32 %v87
    %v89 = vmul.f32 %v85, 0.9
    %v90 = vadd.f32 %v89, %v24
    %v91 = vsub.f32 %v90, %v88
    %vm92 = vcmp.gt.f32.partialorder %v91, 1.0
    %v93 = vsel %vm92, 1, 0
    %v94 = vcvt.s32.f32 %v93
    %v95 = vmul.f32 %v91, 0.9
    %v96 = vadd.f32 %v95, %v24
    %v97 = vsub.f32 %v96, %v94
    %vm98 = vcmp.gt.f32.partialorder %v97, 1.0
    %v99 = vsel %vm98, 1, 0
    %v100 = vcvt.s32.f32 %v99
    %v102 = vrot.slane %v88, 6
    %v105 = vrot.slane %v94, 4
    %v108 = vrot.slane %v100, 2
    %v110 = vsel %vm56, %v82, %v102
    %v111 = vsel %vm58, %v110, %v105
    %v112 = vsel %vm60, %v111, %v108
    %v113 = vpack.c.bf16 %v112, %v112
    %114 = vst [vmem:[#allocation5 + $0x4] sm:$0xf] %v113
    %v116 = vrot.slane %v85, 6
    %v119 = vrot.slane %v91, 4
    %v122 = vrot.slane %v97, 2
    %v124 = vsel %vm56, %v79, %v116
    %v125 = vsel %vm58, %v124, %v119
    %v126 = vsel %vm60, %v125, %v122
    %127 = vst [vmem:[#allocation6 + $0x8] sm:$0xff] %v126
    // Predicated region
    $region10: #{tpu_custom_call.1} parent=1 // pred_check
      _
    $region11: #{tpu_custom_call.1} parent=1 // pred_check_branch
      %129 = sbr.rel (0) target = $region13
    $region12: #{tpu_custom_call.1} parent=1 // pred_region
      %s131 = ssub.s32 128, 128
      %132 = vsyncadd [#allocation4], %s131
      %s133 = sshll.u32 [#allocation5], 4
      %s134 = int_to_ptr.vmem [resolvable:$true] %s133
      %139 = dma.vmem_to_hbm [thread:$0]  %s134, 128, %s1, [#allocation4], 64, 64, 4
    $region13: #{tpu_custom_call.1} parent=1 // pred_fallthru
      _
    // Predicated region
    $region14: #{tpu_custom_call.1} parent=1 // pred_check
      _
    $region15: #{tpu_custom_call.1} parent=1 // pred_check_branch
      %141 = sbr.rel (0) target = $region17
    $region16: #{tpu_custom_call.1} parent=1 // pred_region
      %s143 = ssub.s32 256, 256
      %144 = vsyncadd [#allocation7], %s143
      %s145 = sshll.u32 [#allocation6], 4
      %s146 = int_to_ptr.vmem [resolvable:$true] %s145
      %151 = dma.vmem_to_hbm [thread:$0]  %s146, 256, %s2, [#allocation7], 128, 128, 8
    $region17: #{tpu_custom_call.1} parent=1 // pred_fallthru
      _
    // Predicated region
    $region18: #{tpu_custom_call.1} parent=1 // pred_check
      _
    $region19: #{tpu_custom_call.1} parent=1 // pred_check_branch
      %153 = sbr.rel (0) target = $region21
    $region20: #{tpu_custom_call.1} parent=1 // pred_region
      %154 = dma.done [#allocation4], 128
    $region21: #{tpu_custom_call.1} parent=1 // pred_fallthru
      _
    // Predicated region
    $region22: #{tpu_custom_call.1} parent=1 // pred_check
      _
    $region23: #{tpu_custom_call.1} parent=1 // pred_check_branch
      %156 = sbr.rel (0) target = $region25
    $region24: #{tpu_custom_call.1} parent=1 // pred_region
      %157 = dma.done [#allocation7], 256
    $region25: #{tpu_custom_call.1} parent=1 // pred_fallthru
      _
    %158 = vsyncpa [#allocation3], 1
    %159 = vsyncpa [#allocation4], 1
    %160 = vsyncpa [#allocation7], 1

</llo_original>
